<compile_context>
chip_gen: v5e
topology: v5e:2x2
jax: 0.10.0
libtpu: 0.0.40
codegen_flags: <defaults>
</compile_context>

<pallas_src>
import functools

import jax
import jax.numpy as jnp
from jax.experimental import pallas as pl
from jax.experimental.pallas import tpu as pltpu


def _label_smoothing_kernel(*refs, smoothing, num_classes, hw_total, tile_hw,
                            n_total, batch_block, has_weight):
    if has_weight:
        pred_ref, tgt_ref, w_ref, out_ref = refs
    else:
        pred_ref, tgt_ref, out_ref = refs

    b = pl.program_id(0)
    j = pl.program_id(1)

    x = pred_ref[...].astype(jnp.float32)                  # (bn, C, T)
    tgt = tgt_ref[...].astype(jnp.int32)                   # (bn, 1, T)

    # log-softmax pieces over the class (sublane) axis.
    m = jnp.max(x, axis=1, keepdims=True)                  # (bn, 1, T)
    z = x - m
    lse = jnp.log(jnp.sum(jnp.exp(z), axis=1, keepdims=True))  # (bn, 1, T)

    cls = jax.lax.broadcasted_iota(jnp.int32, x.shape, 1)  # (bn, C, T)
    tmask = cls == tgt

    smooth_val = (smoothing / (num_classes - 1)) if num_classes > 1 else 0.0
    confidence = 1.0 - smoothing

    if has_weight:
        w = w_ref[...].reshape(1, num_classes, 1)           # (1, C, 1)
        wz = w * z                                           # (bn, C, T)
        sum_w = jnp.sum(w, axis=1, keepdims=True)            # (1, 1, 1)
        sum_wz = jnp.sum(wz, axis=1, keepdims=True)          # (bn, 1, T)
        wz_t = jnp.sum(jnp.where(tmask, wz, 0.0), axis=1, keepdims=True)
        w_t = jnp.sum(jnp.where(tmask, w, 0.0), axis=1, keepdims=True)
        # logp_c = z_c - lse; the (C, T) logp tensor is never formed.
        loss = -(smooth_val * (sum_wz - lse * sum_w)
                 + (confidence - smooth_val) * (wz_t - w_t * lse))
    else:
        # Unweighted specialization: w_c == 1, sum_w == C.
        sum_z = jnp.sum(z, axis=1, keepdims=True)
        z_t = jnp.sum(jnp.where(tmask, z, 0.0), axis=1, keepdims=True)
        loss = -(smooth_val * (sum_z - float(num_classes) * lse)
                 + (confidence - smooth_val) * (z_t - lse))

    # Boundary blocks: padded lanes/rows hold undefined (possibly NaN/Inf)
    # data.  jnp.where is a true select, so masked-out garbage never reaches
    # the sum.  Do NOT replace these selects with multiply-by-mask.
    if hw_total % tile_hw != 0:
        col = j * tile_hw + jax.lax.broadcasted_iota(jnp.int32, loss.shape, 2)
        loss = jnp.where(col < hw_total, loss, 0.0)
    if n_total % batch_block != 0:
        row = b * batch_block + jax.lax.broadcasted_iota(jnp.int32, loss.shape, 0)
        loss = jnp.where(row < n_total, loss, 0.0)

    part = jnp.sum(loss, axis=2, keepdims=True)              # lane reduce
    part = jnp.sum(part, axis=0, keepdims=True)               # fold batch rows
    out_ref[...] = part.reshape(1, 1, 1, 1)


def _chip_budget():
    """(HBM bytes of pred per tile, scoped-VMEM limit) per TPU generation."""
    kind = ""
    try:
        kind = jax.devices()[0].device_kind.lower()
    except Exception:
        pass
    if "v7" in kind or "7x" in kind:
        # 64 MiB/TC physical VMEM: leave headroom for double buffers/scratch.
        return 3 << 20, 48 << 20
    if any(t in kind for t in ("v4", "v5", "v6")):
        # 128 MiB physical VMEM: bigger tiles, higher scoped limit.
        return 5 << 20, 96 << 20
    return 3 << 20, 48 << 20            # unknown chip: conservative


def _auto_tiles(N, C, HW, itemsize):
    tile_bytes, vmem_cap = _chip_budget()
    # Budget in *input elements* (dtype-aware HBM bytes per step), clamped so
    # ~16 tile-sized f32 temporaries + double-buffered inputs fit under the
    # scoped-VMEM limit.
    elems = tile_bytes // itemsize
    elems = min(elems, vmem_cap // (16 * 4))
    pix = max(128, elems // max(C, 1))   # pixels (lanes) per grid step

    if HW > pix:
        # Large spatial plane: tile along HW, one image per step.
        bn = 1
        tile_hw = (pix // 128) * 128
    else:
        # Small spatial plane: whole plane per step, pack images along batch.
        tile_hw = HW
        bn = max(1, min(N, pix // max(HW, 1)))
        if pl.cdiv(N, bn) == 1:
            if N >= 2:
                bn = pl.cdiv(N, 2)       # >= 2 grid steps for 2-TC (v7x) chips
            elif HW >= 256:
                tile_hw = ((pl.cdiv(HW, 2) + 127) // 128) * 128
    return bn, tile_hw, vmem_cap


def label_smoothing_loss(pred, target, *, num_classes, smoothing=0.0,
                         weight=None, reduction='mean',
                         tile_hw=None, batch_block=None):
    """pred: (N, C, H, W) float (f32/bf16) logits; target: (N, H, W) ints."""
    assert 0 <= smoothing < 1
    assert reduction in ('mean', 'sum')
    assert not (num_classes == 1 and smoothing > 0), \
        "smoothing > 0 requires num_classes > 1"
    N, C, H, W = pred.shape
    assert C == num_classes
    HW = H * W
    R = N * HW

    # Free reshapes (merge contiguous trailing dims): no HBM transpose pass.
    pred_r = pred.reshape(N, C, HW)
    # Keep targets in their native (possibly narrow) integer dtype; widening
    # to int32 happens per-tile inside the kernel.
    tgt_r = target.reshape(N, 1, HW)

    has_weight = weight is not None

    auto_bn, auto_tile, vmem_cap = _auto_tiles(N, C, HW, pred_r.dtype.itemsize)
    if tile_hw is None:
        tile_hw = auto_tile
    tile_hw = int(min(tile_hw, HW))
    if tile_hw < HW:
        assert tile_hw % 128 == 0, "tile_hw must be a multiple of 128 (lanes)"
    if batch_block is None:
        batch_block = auto_bn if tile_hw == HW else 1
    batch_block = int(max(1, min(batch_block, N)))

    num_b = pl.cdiv(N, batch_block)
    num_j = pl.cdiv(HW, tile_hw)

    kernel = functools.partial(
        _label_smoothing_kernel,
        smoothing=float(smoothing), num_classes=num_classes,
        hw_total=HW, tile_hw=tile_hw,
        n_total=N, batch_block=batch_block, has_weight=has_weight)

    in_specs = [
        # pred tile: classes on sublanes, pixels on lanes, images on the
        # leading dim.
        pl.BlockSpec((batch_block, C, tile_hw), lambda b, j: (b, 0, j)),
        # lane-dense targets in their native integer dtype.
        pl.BlockSpec((batch_block, 1, tile_hw), lambda b, j: (b, 0, j)),
    ]
    args = [pred_r, tgt_r]
    if has_weight:
        w = jnp.asarray(weight, jnp.float32).reshape(C, 1)
        in_specs.append(pl.BlockSpec((C, 1), lambda b, j: (0, 0)))
        args.append(w)

    partials = pl.pallas_call(
        kernel,
        out_shape=jax.ShapeDtypeStruct((num_b, num_j, 1, 1), jnp.float32),
        grid_spec=pltpu.PrefetchScalarGridSpec(
            num_scalar_prefetch=0,
            grid=(num_b, num_j),
            in_specs=in_specs,
            # One partial sum per grid step -> no serialized accumulator.
            out_specs=pl.BlockSpec((1, 1, 1, 1), lambda b, j: (b, j, 0, 0)),
        ),
        compiler_params=pltpu.CompilerParams(
            dimension_semantics=("parallel", "parallel"),
            vmem_limit_bytes=int(vmem_cap)),
    )(*args)

    total = jnp.sum(partials, dtype=jnp.float32)
    if reduction == 'mean':
        # Plain mean over N*H*W items (matches the torch module's
        # loss_per_item.mean(), even when class weights are given).
        return total / jnp.float32(R)
    return total


def _reference(pred, target, *, num_classes, smoothing, weight, reduction):
    logp = jax.nn.log_softmax(pred.astype(jnp.float32), axis=1)
    if weight is not None:
        logp = logp * weight.reshape(1, -1, 1, 1)
    confidence = 1.0 - smoothing
    smooth_val = smoothing / (num_classes - 1)
    onehot = jax.nn.one_hot(target.astype(jnp.int32), num_classes, axis=1,
                            dtype=jnp.float32)
    true_dist = onehot * confidence + (1.0 - onehot) * smooth_val
    loss_per_item = -jnp.sum(true_dist * logp, axis=1)
    return loss_per_item.mean() if reduction == 'mean' else loss_per_item.sum()


if __name__ == "__main__":
    key = jax.random.PRNGKey(0)
    k1, k2 = jax.random.split(key)

    N, C, H, W = 2, 8, 16, 16
    smoothing = 0.1
    pred = jax.random.normal(k1, (N, C, H, W), jnp.float32)
    target = jax.random.randint(k2, (N, H, W), 0, C, jnp.int32)
    weight = jnp.linspace(0.5, 1.5, C, dtype=jnp.float32)

    # 1) f32 logits, class weights, mean reduction (batch-parallel 2-step grid).
    loss = label_smoothing_loss(pred, target, num_classes=C,
                                smoothing=smoothing, weight=weight,
                                reduction='mean')
    loss = jax.block_until_ready(loss)
    ref = _reference(pred, target, num_classes=C, smoothing=smoothing,
                     weight=weight, reduction='mean')
    assert jnp.allclose(loss, ref, rtol=1e-5, atol=1e-5), (loss, ref)

    # 2) f32 logits, no weights (specialized kernel), sum reduction.
    loss2 = label_smoothing_loss(pred, target, num_classes=C,
                                 smoothing=smoothing, weight=None,
                                 reduction='sum')
    loss2 = jax.block_until_ready(loss2)
    ref2 = _reference(pred, target, num_classes=C, smoothing=smoothing,
                      weight=None, reduction='sum')
    assert jnp.allclose(loss2, ref2, rtol=1e-5, atol=1e-5), (loss2, ref2)

    # 3) bf16 logits + int8 targets, spatial extent not divisible by the tile
    #    (lane-mask path), multi-tile spatial grid.
    H2 = W2 = 20
    pred3 = jax.random.normal(k1, (N, C, H2, W2), jnp.float32)
    target3 = jax.random.randint(k2, (N, H2, W2), 0, C, jnp.int32).astype(jnp.int8)
    pred3_bf16 = pred3.astype(jnp.bfloat16)
    loss3 = label_smoothing_loss(pred3_bf16, target3, num_classes=C,
                                 smoothing=smoothing, weight=weight,
                                 reduction='mean', tile_hw=128)
    loss3 = jax.block_until_ready(loss3)
    ref3 = _reference(pred3_bf16.astype(jnp.float32), target3, num_classes=C,
                      smoothing=smoothing, weight=weight, reduction='mean')
    assert jnp.allclose(loss3, ref3, rtol=1e-4, atol=1e-4), (loss3, ref3)

    # 4) Batch block that does not divide N (batch-row mask path), unweighted.
    N4 = 3
    pred4 = jax.random.normal(k1, (N4, C, H, W), jnp.float32)
    target4 = jax.random.randint(k2, (N4, H, W), 0, C, jnp.int32)
    loss4 = label_smoothing_loss(pred4, target4, num_classes=C,
                                 smoothing=smoothing, weight=None,
                                 reduction='mean', batch_block=2)
    loss4 = jax.block_until_ready(loss4)
    ref4 = _reference(pred4, target4, num_classes=C, smoothing=smoothing,
                      weight=None, reduction='mean')
    assert jnp.allclose(loss4, ref4, rtol=1e-5, atol=1e-5), (loss4, ref4)

    print("KERNEL_OK")
</pallas_src>

<mosaic_0001>
module attributes {stable_mosaic.version = 11 : i64} {
  func.func @_label_smoothing_kernel(%arg0: i32, %arg1: i32, %arg2: memref<1x8x256xf32, #tpu.memory_space<vmem>>, %arg3: memref<1x1x256xi32, #tpu.memory_space<vmem>>, %arg4: memref<8x1xf32, #tpu.memory_space<vmem>>, %arg5: memref<1x1x1x1xf32, #tpu.memory_space<vmem>>) attributes {dimension_semantics = [#tpu.dimension_semantics<parallel>, #tpu.dimension_semantics<parallel>], iteration_bounds = array<i64: 2, 1>, scalar_prefetch = 0 : i64, scratch_operands = 0 : i64, tpu.core_type = #tpu.core_type<tc>, window_params = [{transform_indices = @transform_0, window_bounds = array<i64: 1, 8, 256>}, {transform_indices = @transform_1, window_bounds = array<i64: 1, 1, 256>}, {pipeline_mode = #tpu.pipeline_mode<synchronous>, transform_indices = @transform_2, window_bounds = array<i64: 8, 1>}, {transform_indices = @transform_3, window_bounds = array<i64: 1, 1, 1, 1>}]} {
    %c0 = arith.constant 0 : index
    %c0_0 = arith.constant 0 : index
    %c0_1 = arith.constant 0 : index
    %0 = vector.load %arg2[%c0, %c0_0, %c0_1] : memref<1x8x256xf32, #tpu.memory_space<vmem>>, vector<1x8x256xf32>
    %c0_2 = arith.constant 0 : index
    %c0_3 = arith.constant 0 : index
    %c0_4 = arith.constant 0 : index
    %1 = vector.load %arg3[%c0_2, %c0_3, %c0_4] : memref<1x1x256xi32, #tpu.memory_space<vmem>>, vector<1x1x256xi32>
    %cst = arith.constant dense<0xFF800000> : vector<1x256xf32>
    %2 = vector.multi_reduction <maximumf>, %0, %cst [1] : vector<1x8x256xf32> to vector<1x256xf32>
    %3 = vector.shape_cast %2 : vector<1x256xf32> to vector<1x1x256xf32>
    %4 = vector.broadcast %3 : vector<1x1x256xf32> to vector<1x8x256xf32>
    %5 = arith.subf %0, %4 : vector<1x8x256xf32>
    %6 = math.exp %5 : vector<1x8x256xf32>
    %cst_5 = arith.constant dense<0.000000e+00> : vector<1x256xf32>
    %7 = vector.multi_reduction <add>, %6, %cst_5 [1] : vector<1x8x256xf32> to vector<1x256xf32>
    %8 = vector.shape_cast %7 : vector<1x256xf32> to vector<1x1x256xf32>
    %9 = math.log %8 : vector<1x1x256xf32>
    %10 = tpu.iota {dimensions = array<i32: 1>} : vector<1x8x256xi32>
    %11 = vector.broadcast %1 : vector<1x1x256xi32> to vector<1x8x256xi32>
    %12 = arith.cmpi eq, %10, %11 : vector<1x8x256xi32>
    %c0_6 = arith.constant 0 : index
    %c0_7 = arith.constant 0 : index
    %13 = vector.load %arg4[%c0_6, %c0_7] : memref<8x1xf32, #tpu.memory_space<vmem>>, vector<8x1xf32>
    %14 = vector.shape_cast %13 : vector<8x1xf32> to vector<1x8x1xf32>
    %15 = vector.broadcast %14 : vector<1x8x1xf32> to vector<1x8x256xf32>
    %16 = arith.mulf %15, %5 : vector<1x8x256xf32>
    %cst_8 = arith.constant dense<0.000000e+00> : vector<1x1xf32>
    %17 = vector.multi_reduction <add>, %14, %cst_8 [1] : vector<1x8x1xf32> to vector<1x1xf32>
    %18 = vector.shape_cast %17 : vector<1x1xf32> to vector<1x1x1xf32>
    %cst_9 = arith.constant dense<0.000000e+00> : vector<1x256xf32>
    %19 = vector.multi_reduction <add>, %16, %cst_9 [1] : vector<1x8x256xf32> to vector<1x256xf32>
    %20 = vector.shape_cast %19 : vector<1x256xf32> to vector<1x1x256xf32>
    %cst_10 = arith.constant 0.000000e+00 : f32
    %21 = vector.broadcast %cst_10 : f32 to vector<1x8x256xf32>
    %22 = arith.select %12, %16, %21 : vector<1x8x256xi1>, vector<1x8x256xf32>
    %cst_11 = arith.constant dense<0.000000e+00> : vector<1x256xf32>
    %23 = vector.multi_reduction <add>, %22, %cst_11 [1] : vector<1x8x256xf32> to vector<1x256xf32>
    %24 = vector.shape_cast %23 : vector<1x256xf32> to vector<1x1x256xf32>
    %cst_12 = arith.constant 0.000000e+00 : f32
    %25 = vector.shape_cast %14 : vector<1x8x1xf32> to vector<1x8x1xf32>
    %26 = vector.broadcast %25 : vector<1x8x1xf32> to vector<1x8x256xf32>
    %27 = vector.broadcast %cst_12 : f32 to vector<1x8x256xf32>
    %28 = arith.select %12, %26, %27 : vector<1x8x256xi1>, vector<1x8x256xf32>
    %cst_13 = arith.constant dense<0.000000e+00> : vector<1x256xf32>
    %29 = vector.multi_reduction <add>, %28, %cst_13 [1] : vector<1x8x256xf32> to vector<1x256xf32>
    %30 = vector.shape_cast %29 : vector<1x256xf32> to vector<1x1x256xf32>
    %31 = vector.broadcast %18 : vector<1x1x1xf32> to vector<1x1x256xf32>
    %32 = arith.mulf %9, %31 : vector<1x1x256xf32>
    %33 = arith.subf %20, %32 : vector<1x1x256xf32>
    %cst_14 = arith.constant 0.0142857144 : f32
    %34 = vector.broadcast %cst_14 : f32 to vector<1x1x256xf32>
    %35 = arith.mulf %34, %33 : vector<1x1x256xf32>
    %36 = arith.mulf %30, %9 : vector<1x1x256xf32>
    %37 = arith.subf %24, %36 : vector<1x1x256xf32>
    %cst_15 = arith.constant 0.885714293 : f32
    %38 = vector.broadcast %cst_15 : f32 to vector<1x1x256xf32>
    %39 = arith.mulf %38, %37 : vector<1x1x256xf32>
    %40 = arith.addf %35, %39 : vector<1x1x256xf32>
    %cst_16 = arith.constant 0.000000e+00 : f32
    %41 = vector.broadcast %cst_16 : f32 to vector<1x1x256xf32>
    %42 = arith.subf %41, %40 : vector<1x1x256xf32>
    %cst_17 = arith.constant dense<0.000000e+00> : vector<1x1xf32>
    %43 = vector.multi_reduction <add>, %42, %cst_17 [2] : vector<1x1x256xf32> to vector<1x1xf32>
    %44 = vector.shape_cast %43 : vector<1x1xf32> to vector<1x1x1xf32>
    %cst_18 = arith.constant dense<0.000000e+00> : vector<1x1xf32>
    %45 = vector.multi_reduction <add>, %44, %cst_18 [0] : vector<1x1x1xf32> to vector<1x1xf32>
    %46 = vector.shape_cast %45 : vector<1x1xf32> to vector<1x1x1xf32>
    %47 = vector.shape_cast %46 : vector<1x1x1xf32> to vector<1x1x1x1xf32>
    %c0_19 = arith.constant 0 : index
    %c0_20 = arith.constant 0 : index
    %c0_21 = arith.constant 0 : index
    %c0_22 = arith.constant 0 : index
    %48 = vector.load %arg5[%c0_19, %c0_20, %c0_21, %c0_22] : memref<1x1x1x1xf32, #tpu.memory_space<vmem>>, vector<1x1x1x1xf32>
    tpu.vector_store %arg5[%c0_19, %c0_20, %c0_21, %c0_22], %47 {strides = array<i32>} : memref<1x1x1x1xf32, #tpu.memory_space<vmem>>, vector<1x1x1x1xf32>,
    return
  }
  func.func @transform_0(%arg0: i32, %arg1: i32) -> (i32, i32, i32) {
    %c0_i32 = arith.constant 0 : i32
    %c0_i32_0 = arith.constant 0 : i32
    return %arg0, %c0_i32, %arg1 : i32, i32, i32
  }
  func.func @transform_1(%arg0: i32, %arg1: i32) -> (i32, i32, i32) {
    %c0_i32 = arith.constant 0 : i32
    %c0_i32_0 = arith.constant 0 : i32
    return %arg0, %c0_i32, %arg1 : i32, i32, i32
  }
  func.func @transform_2(%arg0: i32, %arg1: i32) -> (i32, i32) {
    %c0_i32 = arith.constant 0 : i32
    %c0_i32_0 = arith.constant 0 : i32
    %c0_i32_1 = arith.constant 0 : i32
    return %c0_i32, %c0_i32_0 : i32, i32
  }
  func.func @transform_3(%arg0: i32, %arg1: i32) -> (i32, i32, i32, i32) {
    %c0_i32 = arith.constant 0 : i32
    %c0_i32_0 = arith.constant 0 : i32
    %c0_i32_1 = arith.constant 0 : i32
    return %arg0, %arg1, %c0_i32, %c0_i32_0 : i32, i32, i32, i32
  }
}

</mosaic_0001>

<llo_original>
// kernel: tpu_custom_call.1
$region0: #{tpu_custom_call.1}
  #allocation0 [shape = 'u32[]', space=smem, size = 0x4, offset = 0x4, fixed_abs, tag = 'smem constant byte address 0x4 - core index']
  #allocation1 [shape = 'u32[72,128]{1,0:T(1,128)}', space=vmem, size = 0x9000, scoped, tag = 'internal scratch']
  %s0 = inlined_call_operand.hbm [shape: f32[2,8,256], index: 0, kind: input, shape index: {}]
  %s1 = inlined_call_operand.vmem [shape: s32[2,1,256], index: 1, kind: input, shape index: {}]
  %s2 = inlined_call_operand.vmem [shape: f32[8,1], index: 2, kind: input, shape index: {}]
  %s3 = inlined_call_operand.vmem [shape: f32[2,1,1,1], index: 3, kind: output, shape index: {}]
  %s4 = sld [smem:[#allocation0]]
  $region49: #{tpu_custom_call.1} parent=0
    _
  %s6 = ssub.s32 1, %s4
  %s7 = scalar_select 0, %s6, %s4
  $region1: #{tpu_custom_call.1} parent=0
    #allocation2 [shape = 'u8[16384]{0}', space=vmem, size = 0x4000, scoped, tag = 'input window, operand 0']
    #allocation3 [shape = 's32[2]{0}', space=sflag, size = 0x8, scoped, tag = 'scoped memory for tpu_custom_call.1']
    %8 = vsyncpa [#allocation3], 0
    %s9 = scalar_lea.sflag [#allocation3], 1
    %10 = vsyncpa %s9, 0
    loop: start=0, step=1, limit=4
    $region2: #{tpu_custom_call.1} parent=1 // loop_pre_header
      _
    $region3: #{tpu_custom_call.1} parent=1 // loop_header
      %s12 = sphi 0, %s16
      %p13 = scmp.ge.s32.totalorder %s12, 4
      %s19 = sphi 0, %s31
      %s20 = sphi 0, %s27
      %s21 = sphi 0, %s19
      %s22 = sphi 0, %s20
      %s23 = sphi 0, %s21
      %s24 = sphi 0, %s22
      %s36 = sphi 0, %s38
      %s39 = sphi 0, %s36
      %s40 = sphi 0, %s39
      %s56 = sphi 0, %s40
      %s64 = sphi 0, %s66
      %s67 = sphi 0, %s64
      %s68 = sphi 0, %s67
      %s84 = sphi 0, %s68
      %s88 = sphi 0, %s88
      %s90 = sphi 0, %s88
      %s91 = sphi 0, %s90
      %s105 = sphi 0, %s91
      %s113 = sphi 0, %s115
      %s116 = sphi 0, %s113
      %s117 = sphi 0, %s116
      %s133 = sphi 0, %s117
    $region4: #{tpu_custom_call.1} parent=1 // loop_header_branch
      %15 = sbr.rel (%p13) target = $region8
    $region5: #{tpu_custom_call.1} parent=1 // loop_body
      %s17 = ssub.s32 %s12, 1
      %s18 = ssub.s32 %s12, 2
      %s25 = sadd.s32 1, %s20
      %p26 = scmp.ge.s32.totalorder %s25, 1
      %s27 = scalar_select %p26, 0, %s25
      %s28 = sadd.s32 1, %s19
      %s29 = scalar_select %p26, %s28, %s19
      %p30 = scmp.ge.s32.totalorder %s29, 2
      %s31 = scalar_select %p30, 0, %s29
      %s32 = ssub.s32 %s19, %s31
      %s33 = ssub.s32 %s20, %s27
      %s34 = sor.u32 %s32, %s33
      %p35 = scmp.eq.s32.totalorder %s34, 0
      %s37 = sadd.s32 %s36, 1
      %s38 = scalar_select %p35, %s36, %s37
      %p41 = pneg %p35
      %p42 = scmp.eq.s32.totalorder %s12, 1
      %p43 = por %p41, %p42
      %p44 = scmp.ne.s32.totalorder %s36, %s39
      %p45 = scmp.eq.s32.totalorder %s12, 0
      %p46 = por %p44, %p45
      %p47 = scmp.ne.s32.totalorder %s36, %s39
      %p48 = scmp.eq.s32.totalorder %s17, 1
      %p49 = por %p47, %p48
      %p50 = scmp.ne.s32.totalorder %s39, %s40
      %p51 = scmp.eq.s32.totalorder %s17, 0
      %p52 = por %p50, %p51
      %p53 = scmp.ne.s32.totalorder %s39, %s40
      %p54 = scmp.eq.s32.totalorder %s18, 1
      %p55 = por %p53, %p54
      %p57 = scmp.ne.s32.totalorder %s40, %s56
      %p58 = scmp.eq.s32.totalorder %s18, 0
      %p59 = por %p57, %p58
      %s60 = ssub.s32 %s19, %s31
      %s61 = ssub.s32 %s20, %s27
      %s62 = sor.u32 %s60, %s61
      %p63 = scmp.eq.s32.totalorder %s62, 0
      %s65 = sadd.s32 %s64, 1
      %s66 = scalar_select %p63, %s64, %s65
      %p69 = pneg %p63
      %p70 = scmp.eq.s32.totalorder %s12, 1
      %p71 = por %p69, %p70
      %p72 = scmp.ne.s32.totalorder %s64, %s67
      %p73 = scmp.eq.s32.totalorder %s12, 0
      %p74 = por %p72, %p73
      %p75 = scmp.ne.s32.totalorder %s64, %s67
      %p76 = scmp.eq.s32.totalorder %s17, 1
      %p77 = por %p75, %p76
      %p78 = scmp.ne.s32.totalorder %s67, %s68
      %p79 = scmp.eq.s32.totalorder %s17, 0
      %p80 = por %p78, %p79
      %p81 = scmp.ne.s32.totalorder %s67, %s68
      %p82 = scmp.eq.s32.totalorder %s18, 1
      %p83 = por %p81, %p82
      %p85 = scmp.ne.s32.totalorder %s68, %s84
      %p86 = scmp.eq.s32.totalorder %s18, 0
      %p87 = por %p85, %p86
      %s89 = sadd.s32 %s88, 1
      %p92 = scmp.eq.s32.totalorder %s12, 1
      %p93 = scmp.ne.s32.totalorder %s88, %s90
      %p94 = scmp.eq.s32.totalorder %s12, 0
      %p95 = por %p93, %p94
      %p96 = scmp.ne.s32.totalorder %s88, %s90
      %p97 = scmp.eq.s32.totalorder %s17, 1
      %p98 = por %p96, %p97
      %p99 = scmp.ne.s32.totalorder %s90, %s91
      %p100 = scmp.eq.s32.totalorder %s17, 0
      %p101 = por %p99, %p100
      %p102 = scmp.ne.s32.totalorder %s90, %s91
      %p103 = scmp.eq.s32.totalorder %s18, 1
      %p104 = por %p102, %p103
      %p106 = scmp.ne.s32.totalorder %s91, %s105
      %p107 = scmp.eq.s32.totalorder %s18, 0
      %p108 = por %p106, %p107
      %s109 = ssub.s32 %s19, %s31
      %s110 = ssub.s32 %s20, %s27
      %s111 = sor.u32 %s109, %s110
      %p112 = scmp.eq.s32.totalorder %s111, 0
      %s114 = sadd.s32 %s113, 1
      %s115 = scalar_select %p112, %s113, %s114
      %p118 = pneg %p112
      %p119 = scmp.eq.s32.totalorder %s12, 1
      %p120 = por %p118, %p119
      %p121 = scmp.ne.s32.totalorder %s113, %s116
      %p122 = scmp.eq.s32.totalorder %s12, 0
      %p123 = por %p121, %p122
      %p124 = scmp.ne.s32.totalorder %s113, %s116
      %p125 = scmp.eq.s32.totalorder %s17, 1
      %p126 = por %p124, %p125
      %p127 = scmp.ne.s32.totalorder %s116, %s117
      %p128 = scmp.eq.s32.totalorder %s17, 0
      %p129 = por %p127, %p128
      %p130 = scmp.ne.s32.totalorder %s116, %s117
      %p131 = scmp.eq.s32.totalorder %s18, 1
      %p132 = por %p130, %p131
      %p134 = scmp.ne.s32.totalorder %s117, %s133
      %p135 = scmp.eq.s32.totalorder %s18, 0
      %p136 = por %p134, %p135
      %p137 = scmp.le.s32.totalorder 1, %s12
      %p138 = scmp.lt.s32.totalorder %s12, 3
      %p139 = pnand %p137, %p138
      %p140 = pneg %p139
      // Predicated region
      $region9: #{tpu_custom_call.1} parent=5 // pred_check
        _
      $region10: #{tpu_custom_call.1} parent=5 // pred_check_branch
        %142 = sbr.rel (%p139) target = $region12
      $region11: #{tpu_custom_call.1} parent=5 // pred_region
        %s143 = ssub.s32 %s12, 1
        // Predicated region
        $region13: #{tpu_custom_call.1} parent=11 // pred_check
          %p144 = pneg %p101
        $region14: #{tpu_custom_call.1} parent=11 // pred_check_branch
          %146 = sbr.rel (%p144) target = $region16
        $region15: #{tpu_custom_call.1} parent=11 // pred_region
          _
        $region16: #{tpu_custom_call.1} parent=11 // pred_fallthru
          _
      $region12: #{tpu_custom_call.1} parent=5 // pred_fallthru
        _
      %p147 = scmp.lt.s32.totalorder %s12, 2
      // Predicated region
      $region17: #{tpu_custom_call.1} parent=5 // pred_check
        %p148 = pneg %p147
      $region18: #{tpu_custom_call.1} parent=5 // pred_check_branch
        %150 = sbr.rel (%p148) target = $region20
      $region19: #{tpu_custom_call.1} parent=5 // pred_region
        // Predicated region
        $region21: #{tpu_custom_call.1} parent=19 // pred_check
          %p151 = pneg %p46
        $region22: #{tpu_custom_call.1} parent=19 // pred_check_branch
          %153 = sbr.rel (%p151) target = $region24
        $region23: #{tpu_custom_call.1} parent=19 // pred_region
          %s154 = sand.u32 %s36, 1
          %s155 = scalar_lea.sflag [#allocation3], %s154
          %s156 = sand.u32 %s36, 1
          %s157 = smul.addr %s156, 16
          %s158 = scalar_lea.vmem [#allocation2], %s157
          %s159 = smul.u32 2, %s20
          %161 = vsyncadd %s155, 0
          %s162 = smul.addr %s19, 2
          %s163 = sadd.s32 %s159, %s162
          %s164 = smul.addr %s163, 8
          %s165 = scalar_lea.hbm %s0, %s164
          %s167 = sshll.u32 %s165, 4
          %s168 = int_to_ptr.hbm [resolvable:$true] %s167
          %s169 = sshll.u32 %s158, 4
          %s170 = int_to_ptr.vmem [resolvable:$true] %s169
          %172 = dma.hbm_to_vmem [thread:$0]  %s168, 256, %s170, %s155
        $region24: #{tpu_custom_call.1} parent=19 // pred_fallthru
          _
        // Predicated region
        $region25: #{tpu_custom_call.1} parent=19 // pred_check
          %p173 = pneg %p74
        $region26: #{tpu_custom_call.1} parent=19 // pred_check_branch
          %175 = sbr.rel (%p173) target = $region28
        $region27: #{tpu_custom_call.1} parent=19 // pred_region
          %s176 = smul.u32 2, %s20
          %p177 = scmp.lt.s32.totalorder %s19, 1
          %s178 = scalar_select %p177, %s19, 1
          %p179 = scmp.lt.s32.totalorder %s176, 1
          %s180 = scalar_select %p179, %s176, 1
          %s181 = smul.addr %s178, 2
          %s182 = sadd.s32 %s180, %s181
          %s183 = scalar_lea.vmem %s1, %s182
          %s184 = smul.u32 2, %s20
        $region28: #{tpu_custom_call.1} parent=19 // pred_fallthru
          _
      $region20: #{tpu_custom_call.1} parent=5 // pred_fallthru
        _
      %p185 = scmp.le.s32.totalorder 1, %s12
      %p186 = scmp.lt.s32.totalorder %s12, 3
      %p187 = pnand %p185, %p186
      %p188 = pneg %p187
      // Predicated region
      $region29: #{tpu_custom_call.1} parent=5 // pred_check
        _
      $region30: #{tpu_custom_call.1} parent=5 // pred_check_branch
        %190 = sbr.rel (%p187) target = $region32
      $region31: #{tpu_custom_call.1} parent=5 // pred_region
        %s191 = ssub.s32 %s12, 1
        %s192 = sand.u32 %s39, 1
        %s193 = scalar_lea.sflag [#allocation3], %s192
        %s194 = sand.u32 %s39, 1
        %s195 = smul.addr %s194, 16
        %s196 = scalar_lea.vmem [#allocation2], %s195
        // Predicated region
        $region33: #{tpu_custom_call.1} parent=31 // pred_check
          %p197 = pneg %p52
        $region34: #{tpu_custom_call.1} parent=31 // pred_check_branch
          %199 = sbr.rel (%p197) target = $region36
        $region35: #{tpu_custom_call.1} parent=31 // pred_region
          %201 = dma.done %s193, 256
        $region36: #{tpu_custom_call.1} parent=31 // pred_fallthru
          _
        %s202 = sand.u32 %s39, 1
        %s203 = scalar_lea.sflag [#allocation3], %s202
        %s204 = sand.u32 %s39, 1
        %s205 = smul.addr %s204, 16
        %s206 = scalar_lea.vmem [#allocation2], %s205
        %p207 = pneg %p52
        %p208 = pneg %p49
        %s209 = smul.u32 2, %s22
        %p210 = scmp.lt.s32.totalorder %s21, 1
        %s211 = scalar_select %p210, %s21, 1
        %p212 = scmp.lt.s32.totalorder %s209, 1
        %s213 = scalar_select %p212, %s209, 1
        %s214 = smul.addr %s211, 2
        %s215 = sadd.s32 %s213, %s214
        %s216 = scalar_lea.vmem %s1, %s215
        %p217 = pneg %p80
        %p218 = pneg %p77
        %p219 = pneg %p101
        %p220 = pneg %p98
        %p221 = pneg %p129
        %p222 = pneg %p126
        %p223 = scmp.lt.s32.totalorder %s21, 1
        %s224 = scalar_select %p223, %s21, 1
        %p225 = scmp.lt.s32.totalorder %s22, 0
        %s226 = scalar_select %p225, %s22, 0
        %s227 = sadd.s32 %s226, %s224
        %s228 = scalar_lea.vmem %s3, %s227
        %s229 = smul.u32 2, %s22
        %s230 = smul.u32 2, %s22
        %p231 = scmp.lt.s32.totalorder %s21, 1
        %s232 = scalar_select %p231, %s21, 1
        %p233 = scmp.lt.s32.totalorder %s230, 1
        %s234 = scalar_select %p233, %s230, 1
        %s235 = smul.addr %s232, 2
        %s236 = sadd.s32 %s234, %s235
        %s237 = scalar_lea.vmem %s1, %s236
        %s238 = smul.u32 2, %s22
        %p239 = scmp.lt.s32.totalorder %s21, 1
        %s240 = scalar_select %p239, %s21, 1
        %p241 = scmp.lt.s32.totalorder %s22, 0
        %s242 = scalar_select %p241, %s22, 0
        %s243 = sadd.s32 %s242, %s240
        %s244 = scalar_lea.vmem %s3, %s243
        %v245 = vld [vmem:[%s196] sm:$0xff]
        %v246 = vld [vmem:[%s196 + $0x8] sm:$0xff]
        %v247 = vld [vmem:[%s237] sm:$0x3]
        %v248 = vrot.slane %v245, 4
        %v249 = vmax.f32 %v245, %v248
        %v250 = vrot.slane %v249, 2
        %v251 = vmax.f32 %v249, %v250
        %v252 = vrot.slane %v251, 1
        %v253 = vmax.f32 %v251, %v252
        %v254 = vrot.slane %v246, 4
        %v255 = vmax.f32 %v246, %v254
        %v256 = vrot.slane %v255, 2
        %v257 = vmax.f32 %v255, %v256
        %v258 = vrot.slane %v257, 1
        %v259 = vmax.f32 %v257, %v258
        %v260 = vsub.f32 %v245, %v253
        %v261 = vsub.f32 %v246, %v259
        %v262 = vmul.f32 %v260, 1.442695
        %v263 = vpow.pop %v262
        %v264 = vmul.f32 %v261, 1.442695
        %v265 = vpow.pop %v264
        %v266 = vrot.slane %v263, 4
        %v267 = vadd.f32 %v263, %v266
        %v268 = vrot.slane %v267, 2
        %v269 = vadd.f32 %v267, %v268
        %v270 = vrot.slane %v269, 1
        %v271 = vadd.f32 %v269, %v270
        %v272 = vrot.slane %v265, 4
        %v273 = vadd.f32 %v265, %v272
        %v274 = vrot.slane %v273, 2
        %v275 = vadd.f32 %v273, %v274
        %v276 = vrot.slane %v275, 1
        %v277 = vadd.f32 %v275, %v276
        %v278 = vlog2.pop %v271
        %v279 = vmul.f32 %v278, 0.6931472
        %v280 = vlog2.pop %v277
        %v281 = vmul.f32 %v280, 0.6931472
        %v282 = vlaneseq
        %v283 = vshrl.u32 %v282, 7
        %v284 = vperm.slane %v247, 0
        %v285 = vperm.slane %v247, 1
        %vm286 = vcmp.eq.s32.totalorder %v283, %v284
        %vm287 = vcmp.eq.s32.totalorder %v283, %v285
        %v288 = vld [vmem:[%s2] sm:$0xff]
        %290 = vset.pattern.permute.xlu0 0
        %291 = vperm.xlu0 %290, %v288
        %v292 = vpop.permute.xlu0 %291
        %v294 = vmul.f32 %v292, %v260
        %v295 = vmul.f32 %v292, %v261
        %vm296 = vcmask 7168
        %v297 = vsel %vm296, %v288, 0.0
        %v298 = vrot.slane %v297, 4
        %v299 = vadd.f32 %v297, %v298
        %v300 = vrot.slane %v299, 2
        %v301 = vadd.f32 %v299, %v300
        %v302 = vrot.slane %v301, 1
        %v303 = vadd.f32 %v301, %v302
        %v304 = vrot.slane %v294, 4
        %v305 = vadd.f32 %v294, %v304
        %v306 = vrot.slane %v305, 2
        %v307 = vadd.f32 %v305, %v306
        %v308 = vrot.slane %v307, 1
        %v309 = vadd.f32 %v307, %v308
        %v310 = vrot.slane %v295, 4
        %v311 = vadd.f32 %v295, %v310
        %v312 = vrot.slane %v311, 2
        %v313 = vadd.f32 %v311, %v312
        %v314 = vrot.slane %v313, 1
        %v315 = vadd.f32 %v313, %v314
        %v316 = vsel %vm286, %v294, 0.0
        %v317 = vsel %vm287, %v295, 0.0
        %v318 = vrot.slane %v316, 4
        %v319 = vadd.f32 %v316, %v318
        %v320 = vrot.slane %v319, 2
        %v321 = vadd.f32 %v319, %v320
        %v322 = vrot.slane %v321, 1
        %v323 = vadd.f32 %v321, %v322
        %v324 = vrot.slane %v317, 4
        %v325 = vadd.f32 %v317, %v324
        %v326 = vrot.slane %v325, 2
        %v327 = vadd.f32 %v325, %v326
        %v328 = vrot.slane %v327, 1
        %v329 = vadd.f32 %v327, %v328
        %v330 = vsel %vm286, %v292, 0.0
        %v331 = vsel %vm287, %v292, 0.0
        %v332 = vrot.slane %v330, 4
        %v333 = vadd.f32 %v330, %v332
        %v334 = vrot.slane %v333, 2
        %v335 = vadd.f32 %v333, %v334
        %v336 = vrot.slane %v335, 1
        %v337 = vadd.f32 %v335, %v336
        %v338 = vrot.slane %v331, 4
        %v339 = vadd.f32 %v331, %v338
        %v340 = vrot.slane %v339, 2
        %v341 = vadd.f32 %v339, %v340
        %v342 = vrot.slane %v341, 1
        %v343 = vadd.f32 %v341, %v342
        %345 = vset.pattern.permute.xlu0 0
        %346 = vperm.xlu0 %345, %v303
        %v347 = vpop.permute.xlu0 %346
        %v349 = vmul.f32 %v279, %v347
        %v350 = vmul.f32 %v281, %v347
        %v351 = vsub.f32 %v309, %v349
        %v352 = vsub.f32 %v315, %v350
        %v353 = vmul.f32 %v351, 0.014285714
        %v354 = vmul.f32 %v352, 0.014285714
        %v355 = vmul.f32 %v337, %v279
        %v356 = vmul.f32 %v343, %v281
        %v357 = vsub.f32 %v323, %v355
        %v358 = vsub.f32 %v329, %v356
        %v359 = vmul.f32 %v357, 0.8857143
        %v360 = vmul.f32 %v358, 0.8857143
        %v361 = vadd.f32 %v353, %v359
        %v362 = vadd.f32 %v354, %v360
        %v363 = vsub.f32 0.0, %v361
        %v364 = vsub.f32 0.0, %v362
        %v365 = vadd.f32 %v363, %v364
        %366 = vadd.xlane.f32.xlu0 %v365
        %v367 = vpop.xlane.xlu0 %366
        %v368 = vadd.f32 %v367, 0.0
        %vm369 = vcmask 0
        %370 = vst.msk [vmem:[%s244] sm:$0x1] %vm369, %v368
        %p371 = scmp.lt.s32.totalorder %s21, 1
        %s372 = scalar_select %p371, %s21, 1
        %p373 = scmp.lt.s32.totalorder %s22, 0
        %s374 = scalar_select %p373, %s22, 0
        %s375 = sadd.s32 %s374, %s372
        %s376 = scalar_lea.vmem %s3, %s375
        // Predicated region
        $region37: #{tpu_custom_call.1} parent=31 // pred_check
          %p377 = pneg %p126
        $region38: #{tpu_custom_call.1} parent=31 // pred_check_branch
          %379 = sbr.rel (%p377) target = $region40
        $region39: #{tpu_custom_call.1} parent=31 // pred_region
          _
        $region40: #{tpu_custom_call.1} parent=31 // pred_fallthru
          _
      $region32: #{tpu_custom_call.1} parent=5 // pred_fallthru
        _
      %p380 = scmp.le.s32.totalorder 2, %s12
      // Predicated region
      $region41: #{tpu_custom_call.1} parent=5 // pred_check
        %p381 = pneg %p380
      $region42: #{tpu_custom_call.1} parent=5 // pred_check_branch
        %383 = sbr.rel (%p381) target = $region44
      $region43: #{tpu_custom_call.1} parent=5 // pred_region
        %s384 = ssub.s32 %s12, 2
        // Predicated region
        $region45: #{tpu_custom_call.1} parent=43 // pred_check
          %p385 = pneg %p132
        $region46: #{tpu_custom_call.1} parent=43 // pred_check_branch
          %387 = sbr.rel (%p385) target = $region48
        $region47: #{tpu_custom_call.1} parent=43 // pred_region
          %p388 = scmp.lt.s32.totalorder %s23, 1
          %s389 = scalar_select %p388, %s23, 1
          %p390 = scmp.lt.s32.totalorder %s24, 0
          %s391 = scalar_select %p390, %s24, 0
          %s392 = sadd.s32 %s391, %s389
          %s393 = scalar_lea.vmem %s3, %s392
        $region48: #{tpu_custom_call.1} parent=43 // pred_fallthru
          _
      $region44: #{tpu_custom_call.1} parent=5 // pred_fallthru
        _
    $region6: #{tpu_custom_call.1} parent=1 // loop_footer
      %s16 = sadd.s32 1, %s12
    $region7: #{tpu_custom_call.1} parent=1 // loop_footer_branch
      %11 = sbr.rel target = $region3
    $region8: #{tpu_custom_call.1} parent=1 // loop_exit
      _
    %394 = vsyncpa [#allocation3], 1
    %s395 = scalar_lea.sflag [#allocation3], 1
    %396 = vsyncpa %s395, 1

</llo_original>
